<compile_context>
chip_gen: v7x
topology: tpu7x:2x2x1
jax: 0.10.0
libtpu: 0.0.40
codegen_flags: <defaults>
</compile_context>

<pallas_src>
import functools

import jax
import jax.numpy as jnp
from jax.experimental import pallas as pl
from jax.experimental.pallas import tpu as pltpu

EPS = 1e-5


# ------------------------------- helpers ----------------------------------- #

def _vmem():
    # whole-array block resident in VMEM (everything here is tiny)
    return pl.BlockSpec(memory_space=pltpu.MemorySpace.VMEM)


# ------------------------------ Pallas kernel ------------------------------- #

def _bn_train(y, gb):
    """BatchNorm1d (training mode, biased variance), single-pass stats + folded affine.

    gb is the packed (2, C) [gamma; beta] slab for this layer.
    """
    gamma = gb[0:1, :]
    beta = gb[1:2, :]
    inv_b = 1.0 / y.shape[0]                       # static python float
    mean = jnp.sum(y, axis=0, keepdims=True) * inv_b
    mean_sq = jnp.sum(y * y, axis=0, keepdims=True) * inv_b
    var = mean_sq - mean * mean                    # E[y^2] - E[y]^2
    scale = gamma * jax.lax.rsqrt(var + EPS)       # rsqrt -> EUP slot
    shift = beta - mean * scale
    return y * scale + shift


def residual_block_kernel(x_ref, w1_ref, bn1_ref, w2_ref, bn2_ref,
                          *rest, has_downsample):
    """Fused ResidualBlock forward.

    out = relu( bn2(fc2( relu(bn1(fc1(x))) )) + residual )
    residual = x                     (has_downsample=False)
             = bn_d(fc_d(x))         (has_downsample=True)

    Linear biases are intentionally omitted: they feed directly into BatchNorm,
    whose batch-mean subtraction cancels any per-column additive bias exactly.
    """
    if has_downsample:
        wd_ref, bnd_ref, o_ref = rest
    else:
        (o_ref,) = rest

    x = x_ref[...]                                                     # (B, Cin)

    # fc1 -> bn1 -> relu
    h = jnp.dot(x, w1_ref[...], preferred_element_type=jnp.float32)
    h = jnp.maximum(_bn_train(h, bn1_ref[...]), 0.0)                   # (B, H)

    # fc2 -> bn2
    y = jnp.dot(h, w2_ref[...], preferred_element_type=jnp.float32)
    y = _bn_train(y, bn2_ref[...])                                     # (B, Cout)

    # residual path
    if has_downsample:
        r = jnp.dot(x, wd_ref[...], preferred_element_type=jnp.float32)
        r = _bn_train(r, bnd_ref[...])
    else:
        r = x

    # residual add + final ReLU, single store
    o_ref[...] = jnp.maximum(y + r, 0.0)


# ------------------------------ Pallas wrapper ------------------------------ #

def residual_block_pallas(x, kp):
    """One fused pallas_call for the whole block (logical-width tensors)."""
    has_down = kp["down"] is not None
    B = x.shape[0]
    out_channels = kp["fc2_w"].shape[1]

    args = [x, kp["fc1_w"], kp["bn1"], kp["fc2_w"], kp["bn2"]]
    if has_down:
        args += [kp["down"]["fc_w"], kp["down"]["bn"]]

    return pl.pallas_call(
        functools.partial(residual_block_kernel, has_downsample=has_down),
        out_shape=jax.ShapeDtypeStruct((B, out_channels), jnp.float32),
        in_specs=[_vmem()] * len(args),
        out_specs=_vmem(),
    )(*args)


residual_block_forward = jax.jit(residual_block_pallas)


# --------------------------- parameter construction ------------------------- #

def init_linear(key, fan_in, fan_out):
    # PyTorch nn.Linear default init; weight stored pre-transposed as (in, out).
    k1, k2 = jax.random.split(key)
    bound = 1.0 / jnp.sqrt(float(fan_in))
    w = jax.random.uniform(k1, (fan_in, fan_out), jnp.float32, -bound, bound)
    b = jax.random.uniform(k2, (1, fan_out), jnp.float32, -bound, bound)
    return {"w": w, "b": b}


def init_bn(dim):
    return {"gamma": jnp.ones((1, dim), jnp.float32),
            "beta": jnp.zeros((1, dim), jnp.float32)}


def init_residual_block(key, in_channels, out_channels, with_downsample):
    hidden = 2 * in_channels
    k1, k2, k3 = jax.random.split(key, 3)
    p = {
        "fc1": init_linear(k1, in_channels, hidden), "bn1": init_bn(hidden),
        "fc2": init_linear(k2, hidden, out_channels), "bn2": init_bn(out_channels),
        "down": None,
    }
    if with_downsample:
        p["down"] = {"fc": init_linear(k3, in_channels, out_channels),
                     "bn": init_bn(out_channels)}
    return p


def pack_kernel_params(p):
    """Kernel-side parameter packing (done once, outside the hot path).

    - Linear biases are dropped (cancelled by the following BatchNorm).
    - Each layer's (gamma, beta) pair is stacked into one (2, C) slab so the
      kernel sees a single operand / DMA per BN layer.
    """
    kp = {
        "fc1_w": p["fc1"]["w"],
        "bn1": jnp.concatenate([p["bn1"]["gamma"], p["bn1"]["beta"]], axis=0),
        "fc2_w": p["fc2"]["w"],
        "bn2": jnp.concatenate([p["bn2"]["gamma"], p["bn2"]["beta"]], axis=0),
        "down": None,
    }
    if p["down"] is not None:
        kp["down"] = {
            "fc_w": p["down"]["fc"]["w"],
            "bn": jnp.concatenate([p["down"]["bn"]["gamma"],
                                   p["down"]["bn"]["beta"]], axis=0),
        }
    return kp


# ------------------------------ pure-JAX reference -------------------------- #
# Faithful to the PyTorch module: includes the Linear biases and uses the
# textbook two-pass variance; the kernel's bias-elision / one-pass stats must
# agree with this to within float tolerance.

def _ref_bn(y, g, b):
    mean = jnp.mean(y, axis=0, keepdims=True)
    var = jnp.mean(jnp.square(y - mean), axis=0, keepdims=True)
    return (y - mean) / jnp.sqrt(var + EPS) * g + b


def residual_block_reference(x, p):
    h = jnp.maximum(_ref_bn(x @ p["fc1"]["w"] + p["fc1"]["b"],
                            p["bn1"]["gamma"], p["bn1"]["beta"]), 0.0)
    y = _ref_bn(h @ p["fc2"]["w"] + p["fc2"]["b"],
                p["bn2"]["gamma"], p["bn2"]["beta"])
    if p["down"] is not None:
        r = _ref_bn(x @ p["down"]["fc"]["w"] + p["down"]["fc"]["b"],
                    p["down"]["bn"]["gamma"], p["down"]["bn"]["beta"])
    else:
        r = x
    return jnp.maximum(y + r, 0.0)


# ----------------------------------- main ------------------------------------ #

if __name__ == "__main__":
    key = jax.random.PRNGKey(0)
    k_p1, k_p2, k_x1, k_x2 = jax.random.split(key, 4)

    batch = 8  # sublane-aligned for f32

    # Case 1: identity residual (in_channels == out_channels, down_sample=None)
    in_c1, out_c1 = 16, 16
    p1 = init_residual_block(k_p1, in_c1, out_c1, with_downsample=False)
    kp1 = pack_kernel_params(p1)
    x1 = jax.random.normal(k_x1, (batch, in_c1), jnp.float32)

    out1 = jax.block_until_ready(residual_block_forward(x1, kp1))
    ref1 = residual_block_reference(x1, p1)
    assert out1.shape == (batch, out_c1)
    assert jnp.allclose(out1, ref1, atol=1e-4, rtol=1e-4)

    # Case 2: projection residual (in_channels != out_channels, Linear+BN downsample)
    in_c2, out_c2 = 16, 32
    p2 = init_residual_block(k_p2, in_c2, out_c2, with_downsample=True)
    kp2 = pack_kernel_params(p2)
    x2 = jax.random.normal(k_x2, (batch, in_c2), jnp.float32)

    out2 = jax.block_until_ready(residual_block_forward(x2, kp2))
    ref2 = residual_block_reference(x2, p2)
    assert out2.shape == (batch, out_c2)
    assert jnp.allclose(out2, ref2, atol=1e-4, rtol=1e-4)

    print("KERNEL_OK")
</pallas_src>

<mosaic_0001>
module attributes {stable_mosaic.version = 11 : i64} {
  func.func @residual_block_kernel(%arg0: memref<8x16xf32, #tpu.memory_space<vmem>>, %arg1: memref<16x32xf32, #tpu.memory_space<vmem>>, %arg2: memref<2x32xf32, #tpu.memory_space<vmem>>, %arg3: memref<32x16xf32, #tpu.memory_space<vmem>>, %arg4: memref<2x16xf32, #tpu.memory_space<vmem>>, %arg5: memref<8x16xf32, #tpu.memory_space<vmem>>) attributes {dimension_semantics = [], scalar_prefetch = 0 : i64, scratch_operands = 0 : i64, tpu.core_type = #tpu.core_type<tc>} {
    %c0 = arith.constant 0 : index
    %c0_0 = arith.constant 0 : index
    %0 = vector.load %arg0[%c0, %c0_0] : memref<8x16xf32, #tpu.memory_space<vmem>>, vector<8x16xf32>
    %c0_1 = arith.constant 0 : index
    %c0_2 = arith.constant 0 : index
    %1 = vector.load %arg1[%c0_1, %c0_2] : memref<16x32xf32, #tpu.memory_space<vmem>>, vector<16x32xf32>
    %cst = arith.constant dense<0.000000e+00> : vector<8x32xf32>
    %2 = tpu.matmul %0, %1, %cst {dimension_numbers = #tpu.dot_dimension_numbers<[1], [0], [0], [1], [0, 0, 1, 1], [], []>} : vector<8x16xf32>, vector<16x32xf32>, vector<8x32xf32> -> vector<8x32xf32>
    %c0_3 = arith.constant 0 : index
    %c0_4 = arith.constant 0 : index
    %3 = vector.load %arg2[%c0_3, %c0_4] : memref<2x32xf32, #tpu.memory_space<vmem>>, vector<2x32xf32>
    %4 = vector.extract_strided_slice %3 {offsets = [0, 0], sizes = [1, 32], strides = [1, 1]} : vector<2x32xf32> to vector<1x32xf32>
    %5 = vector.extract_strided_slice %3 {offsets = [1, 0], sizes = [1, 32], strides = [1, 1]} : vector<2x32xf32> to vector<1x32xf32>
    %cst_5 = arith.constant dense<0.000000e+00> : vector<32xf32>
    %6 = vector.multi_reduction <add>, %2, %cst_5 [0] : vector<8x32xf32> to vector<32xf32>
    %7 = vector.shape_cast %6 : vector<32xf32> to vector<1x32xf32>
    %cst_6 = arith.constant 1.250000e-01 : f32
    %8 = vector.broadcast %cst_6 : f32 to vector<1x32xf32>
    %9 = arith.mulf %7, %8 : vector<1x32xf32>
    %10 = arith.mulf %2, %2 : vector<8x32xf32>
    %cst_7 = arith.constant dense<0.000000e+00> : vector<32xf32>
    %11 = vector.multi_reduction <add>, %10, %cst_7 [0] : vector<8x32xf32> to vector<32xf32>
    %12 = vector.shape_cast %11 : vector<32xf32> to vector<1x32xf32>
    %cst_8 = arith.constant 1.250000e-01 : f32
    %13 = vector.broadcast %cst_8 : f32 to vector<1x32xf32>
    %14 = arith.mulf %12, %13 : vector<1x32xf32>
    %15 = arith.mulf %9, %9 : vector<1x32xf32>
    %16 = arith.subf %14, %15 : vector<1x32xf32>
    %cst_9 = arith.constant 9.99999974E-6 : f32
    %17 = vector.broadcast %cst_9 : f32 to vector<1x32xf32>
    %18 = arith.addf %16, %17 : vector<1x32xf32>
    %19 = math.rsqrt %18 : vector<1x32xf32>
    %20 = arith.mulf %4, %19 : vector<1x32xf32>
    %21 = arith.mulf %9, %20 : vector<1x32xf32>
    %22 = arith.subf %5, %21 : vector<1x32xf32>
    %23 = vector.broadcast %20 : vector<1x32xf32> to vector<8x32xf32>
    %24 = arith.mulf %2, %23 : vector<8x32xf32>
    %25 = vector.broadcast %22 : vector<1x32xf32> to vector<8x32xf32>
    %26 = arith.addf %24, %25 : vector<8x32xf32>
    %cst_10 = arith.constant 0.000000e+00 : f32
    %27 = vector.broadcast %cst_10 : f32 to vector<8x32xf32>
    %28 = arith.maximumf %26, %27 : vector<8x32xf32>
    %c0_11 = arith.constant 0 : index
    %c0_12 = arith.constant 0 : index
    %29 = vector.load %arg3[%c0_11, %c0_12] : memref<32x16xf32, #tpu.memory_space<vmem>>, vector<32x16xf32>
    %cst_13 = arith.constant dense<0.000000e+00> : vector<8x16xf32>
    %30 = tpu.matmul %28, %29, %cst_13 {dimension_numbers = #tpu.dot_dimension_numbers<[1], [0], [0], [1], [0, 0, 1, 1], [], []>} : vector<8x32xf32>, vector<32x16xf32>, vector<8x16xf32> -> vector<8x16xf32>
    %c0_14 = arith.constant 0 : index
    %c0_15 = arith.constant 0 : index
    %31 = vector.load %arg4[%c0_14, %c0_15] : memref<2x16xf32, #tpu.memory_space<vmem>>, vector<2x16xf32>
    %32 = vector.extract_strided_slice %31 {offsets = [0, 0], sizes = [1, 16], strides = [1, 1]} : vector<2x16xf32> to vector<1x16xf32>
    %33 = vector.extract_strided_slice %31 {offsets = [1, 0], sizes = [1, 16], strides = [1, 1]} : vector<2x16xf32> to vector<1x16xf32>
    %cst_16 = arith.constant dense<0.000000e+00> : vector<16xf32>
    %34 = vector.multi_reduction <add>, %30, %cst_16 [0] : vector<8x16xf32> to vector<16xf32>
    %35 = vector.shape_cast %34 : vector<16xf32> to vector<1x16xf32>
    %cst_17 = arith.constant 1.250000e-01 : f32
    %36 = vector.broadcast %cst_17 : f32 to vector<1x16xf32>
    %37 = arith.mulf %35, %36 : vector<1x16xf32>
    %38 = arith.mulf %30, %30 : vector<8x16xf32>
    %cst_18 = arith.constant dense<0.000000e+00> : vector<16xf32>
    %39 = vector.multi_reduction <add>, %38, %cst_18 [0] : vector<8x16xf32> to vector<16xf32>
    %40 = vector.shape_cast %39 : vector<16xf32> to vector<1x16xf32>
    %cst_19 = arith.constant 1.250000e-01 : f32
    %41 = vector.broadcast %cst_19 : f32 to vector<1x16xf32>
    %42 = arith.mulf %40, %41 : vector<1x16xf32>
    %43 = arith.mulf %37, %37 : vector<1x16xf32>
    %44 = arith.subf %42, %43 : vector<1x16xf32>
    %cst_20 = arith.constant 9.99999974E-6 : f32
    %45 = vector.broadcast %cst_20 : f32 to vector<1x16xf32>
    %46 = arith.addf %44, %45 : vector<1x16xf32>
    %47 = math.rsqrt %46 : vector<1x16xf32>
    %48 = arith.mulf %32, %47 : vector<1x16xf32>
    %49 = arith.mulf %37, %48 : vector<1x16xf32>
    %50 = arith.subf %33, %49 : vector<1x16xf32>
    %51 = vector.broadcast %48 : vector<1x16xf32> to vector<8x16xf32>
    %52 = arith.mulf %30, %51 : vector<8x16xf32>
    %53 = vector.broadcast %50 : vector<1x16xf32> to vector<8x16xf32>
    %54 = arith.addf %52, %53 : vector<8x16xf32>
    %55 = arith.addf %54, %0 : vector<8x16xf32>
    %cst_21 = arith.constant 0.000000e+00 : f32
    %56 = vector.broadcast %cst_21 : f32 to vector<8x16xf32>
    %57 = arith.maximumf %55, %56 : vector<8x16xf32>
    %c0_22 = arith.constant 0 : index
    %c0_23 = arith.constant 0 : index
    %58 = vector.load %arg5[%c0_22, %c0_23] : memref<8x16xf32, #tpu.memory_space<vmem>>, vector<8x16xf32>
    tpu.vector_store %arg5[%c0_22, %c0_23], %57 {strides = array<i32>} : memref<8x16xf32, #tpu.memory_space<vmem>>, vector<8x16xf32>,
    return
  }
}

</mosaic_0001>

<llo_original>
// kernel: residual_block_pallas.1
$region0: #{residual_block_pallas.1}
  #allocation0 [shape = 'u32[]', space=smem, size = 0x4, offset = 0x4, fixed_abs, tag = 'smem constant byte address 0x4 - core index']
  #allocation1 [shape = 'u32[144,128]{1,0:T(1,128)}', space=vmem, size = 0x12000, scoped, tag = 'internal scratch']
  %s0 = inlined_call_operand.vmem [shape: f32[8,16], index: 0, kind: input, shape index: {}]
  %s1 = inlined_call_operand.vmem [shape: f32[16,32], index: 1, kind: input, shape index: {}]
  %s2 = inlined_call_operand.vmem [shape: f32[2,32], index: 2, kind: input, shape index: {}]
  %s3 = inlined_call_operand.vmem [shape: f32[32,16], index: 3, kind: input, shape index: {}]
  %s4 = inlined_call_operand.vmem [shape: f32[2,16], index: 4, kind: input, shape index: {}]
  %s5 = inlined_call_operand.hbm [shape: f32[8,16], index: 5, kind: output, shape index: {}]
  %s6 = sld [smem:[#allocation0]]
  $region30: #{residual_block_pallas.1} parent=0
    _
  %s8 = ssub.s32 1, %s6
  %s9 = scalar_select 0, %s8, %s6
  $region1: #{residual_block_pallas.1} parent=0
    #allocation2 [shape = 'u8[4096]{0}', space=vmem, size = 0x1000, scoped, tag = 'output window, operand 0, single buffered']
    #allocation3 [shape = 's32[1]{0}', space=sflag, size = 0x4, scoped, tag = 'scoped memory for residual_block_pallas.1']
    %10 = vsyncpa [#allocation3], 0
    // Predicated region
    $region2: #{residual_block_pallas.1} parent=1 // pred_check
      _
    $region3: #{residual_block_pallas.1} parent=1 // pred_check_branch
      %12 = sbr.rel (0) target = $region5
    $region4: #{residual_block_pallas.1} parent=1 // pred_region
      _
    $region5: #{residual_block_pallas.1} parent=1 // pred_fallthru
      _
    // Predicated region
    $region6: #{residual_block_pallas.1} parent=1 // pred_check
      _
    $region7: #{residual_block_pallas.1} parent=1 // pred_check_branch
      %14 = sbr.rel (0) target = $region9
    $region8: #{residual_block_pallas.1} parent=1 // pred_region
      _
    $region9: #{residual_block_pallas.1} parent=1 // pred_fallthru
      _
    // Predicated region
    $region10: #{residual_block_pallas.1} parent=1 // pred_check
      _
    $region11: #{residual_block_pallas.1} parent=1 // pred_check_branch
      %16 = sbr.rel (0) target = $region13
    $region12: #{residual_block_pallas.1} parent=1 // pred_region
      _
    $region13: #{residual_block_pallas.1} parent=1 // pred_fallthru
      _
    // Predicated region
    $region14: #{residual_block_pallas.1} parent=1 // pred_check
      _
    $region15: #{residual_block_pallas.1} parent=1 // pred_check_branch
      %18 = sbr.rel (0) target = $region17
    $region16: #{residual_block_pallas.1} parent=1 // pred_region
      _
    $region17: #{residual_block_pallas.1} parent=1 // pred_fallthru
      _
    // Predicated region
    $region18: #{residual_block_pallas.1} parent=1 // pred_check
      _
    $region19: #{residual_block_pallas.1} parent=1 // pred_check_branch
      %20 = sbr.rel (0) target = $region21
    $region20: #{residual_block_pallas.1} parent=1 // pred_region
      _
    $region21: #{residual_block_pallas.1} parent=1 // pred_fallthru
      _
    %v21 = vld [vmem:[%s0] sm:$0xff]
    %v22 = vld [vmem:[%s1] sm:$0xff]
    %v23 = vld [vmem:[%s1 + $0x8] sm:$0xff]
    %vm24 = vcmask 130048
    %v26 = vsel %vm24, %v21, 0
    %28 = vmatprep.subr.mxu0 0.0
    %29 = vmatpush1.msra.mxu0 %v22
    %30 = vmatprep.subr.mxu0 0.0
    %31 = vmatpush1.msra.mxu0 %v23
    %32 = vmatprep.subr.mxu0 0.0
    %33 = vmatpush1.msra.mxu0 0.0
    %34 = vmatprep.subr.mxu0 0.0
    %35 = vmatpush1.msra.mxu0 0.0
    %36 = vmatprep.subr.mxu0 0.0
    %37 = vmatpush1.msra.mxu0 0.0
    %38 = vmatprep.subr.mxu0 0.0
    %39 = vmatpush1.msra.mxu0 0.0
    %40 = vmatprep.subr.mxu0 0.0
    %41 = vmatpush1.msra.mxu0 0.0
    %42 = vmatprep.subr.mxu0 0.0
    %43 = vmatpush1.msra.mxu0 0.0
    %44 = vmatprep.subr.mxu0 0.0
    %45 = vmatpush1.msra.mxu0 0.0
    %46 = vmatprep.subr.mxu0 0.0
    %47 = vmatpush1.msra.mxu0 0.0
    %48 = vmatprep.subr.mxu0 0.0
    %49 = vmatpush1.msra.mxu0 0.0
    %50 = vmatprep.subr.mxu0 0.0
    %51 = vmatpush1.msra.mxu0 0.0
    %52 = vmatprep.subr.mxu0 0.0
    %53 = vmatpush1.msra.mxu0 0.0
    %54 = vmatprep.subr.mxu0 0.0
    %55 = vmatpush1.msra.mxu0 0.0
    %56 = vmatprep.subr.mxu0 0.0
    %57 = vmatpush1.msra.mxu0 0.0
    %58 = vmatprep.subr.mxu0 0.0
    %59 = vmatpush1.msra.mxu0 0.0
    %60 = vmatprep.subr.mxu0 0.0
    %61 = vmatpush1.msra.mxu0 0.0
    %62 = vmatprep.subr.mxu0 0.0
    %63 = vmatpush1.msra.mxu0 0.0
    %64 = vmatprep.subr.mxu0 0.0
    %65 = vmatpush1.msra.mxu0 0.0
    %66 = vmatprep.subr.mxu0 0.0
    %67 = vmatpush1.msra.mxu0 0.0
    %68 = vmatprep.subr.mxu0 0.0
    %69 = vmatpush1.msra.mxu0 0.0
    %70 = vmatprep.subr.mxu0 0.0
    %71 = vmatpush1.msra.mxu0 0.0
    %72 = vmatprep.subr.mxu0 0.0
    %73 = vmatpush1.msra.mxu0 0.0
    %74 = vmatprep.subr.mxu0 0.0
    %75 = vmatpush1.msra.mxu0 0.0
    %76 = vmatprep.subr.mxu0 0.0
    %77 = vmatpush1.msra.mxu0 0.0
    %78 = vmatprep.subr.mxu0 0.0
    %79 = vmatpush1.msra.mxu0 0.0
    %80 = vmatprep.subr.mxu0 0.0
    %81 = vmatpush1.msra.mxu0 0.0
    %82 = vmatprep.subr.mxu0 0.0
    %83 = vmatpush1.msra.mxu0 0.0
    %84 = vmatprep.subr.mxu0 0.0
    %85 = vmatpush1.msra.mxu0 0.0
    %86 = vmatprep.subr.mxu0 0.0
    %87 = vmatpush1.msra.mxu0 0.0
    %88 = vmatprep.subr.mxu0 0.0
    %89 = vmatpush1.msra.mxu0 0.0
    %90 = vmatprep.subr.mxu0 0.0
    %91 = vmatpush1.msra.mxu0 0.0
    %92 = vmatprep.mubr.f32.mxu0 0.0
    %93 = vmatmul.mubr.f32.gmra.mrb[0].mxu0 %v26
    %v94 = vpop.f32.mrb[0].mxu0
    %v95 = vadd.f32 0.0, %v94
    %v96 = vpop.f32.mrb[0].mxu0
    %97 = vdwg.mxu0
    %v98 = vld [vmem:[%s2] sm:$0x3]
    %vm99 = vcmask 261120
    %v100 = vsel %vm99, %v95, 0.0
    %v101 = vrot.slane %v100, 4
    %v102 = vadd.f32 %v100, %v101
    %v103 = vrot.slane %v102, 2
    %v104 = vadd.f32 %v102, %v103
    %v105 = vrot.slane %v104, 1
    %v106 = vadd.f32 %v104, %v105
    %v107 = vmul.f32 %v106, 0.125
    %v108 = vmul.f32 %v95, %v95
    %v109 = vsel %vm99, %v108, 0.0
    %v110 = vrot.slane %v109, 4
    %v111 = vadd.f32 %v109, %v110
    %v112 = vrot.slane %v111, 2
    %v113 = vadd.f32 %v111, %v112
    %v114 = vrot.slane %v113, 1
    %v115 = vadd.f32 %v113, %v114
    %v116 = vmul.f32 %v115, 0.125
    %v117 = vmul.f32 %v107, %v107
    %v118 = vsub.f32 %v116, %v117
    %v119 = vadd.f32 %v118, 1e-05
    %v120 = vrsqrt.pop %v119
    %v121 = vmul.f32 %v98, %v120
    %v122 = vmul.f32 %v107, %v121
    %v124 = vrot.slane %v122, 7
    %v126 = vsub.f32 %v98, %v124
    %v127 = vlaneseq
    %v128 = vshrl.u32 %v127, 7
    %v129 = vsub.s32 0, %v128
    %v130 = vrot.slane %v121, %v129
    %v131 = vmul.f32 %v95, %v130
    %v132 = vlaneseq
    %v133 = vshrl.u32 %v132, 7
    %v134 = vsub.s32 1, %v133
    %v135 = vrot.slane %v126, %v134
    %v136 = vadd.f32 %v131, %v135
    %v137 = vmax.f32 %v136, 0.0
    %v138 = vld [vmem:[%s3] sm:$0xff]
    %v139 = vld [vmem:[%s3 + $0x8] sm:$0xff]
    %v140 = vld [vmem:[%s3 + $0x10] sm:$0xff]
    %v141 = vld [vmem:[%s3 + $0x18] sm:$0xff]
    %v143 = vsel %vm99, %v137, 0
    %145 = vmatprep.subr.mxu0 0.0
    %146 = vmatpush1.msra.mxu0 %v138
    %147 = vmatprep.subr.mxu0 0.0
    %148 = vmatpush1.msra.mxu0 %v139
    %149 = vmatprep.subr.mxu0 0.0
    %150 = vmatpush1.msra.mxu0 %v140
    %151 = vmatprep.subr.mxu0 0.0
    %152 = vmatpush1.msra.mxu0 %v141
    %153 = vmatprep.subr.mxu0 0.0
    %154 = vmatpush1.msra.mxu0 0.0
    %155 = vmatprep.subr.mxu0 0.0
    %156 = vmatpush1.msra.mxu0 0.0
    %157 = vmatprep.subr.mxu0 0.0
    %158 = vmatpush1.msra.mxu0 0.0
    %159 = vmatprep.subr.mxu0 0.0
    %160 = vmatpush1.msra.mxu0 0.0
    %161 = vmatprep.subr.mxu0 0.0
    %162 = vmatpush1.msra.mxu0 0.0
    %163 = vmatprep.subr.mxu0 0.0
    %164 = vmatpush1.msra.mxu0 0.0
    %165 = vmatprep.subr.mxu0 0.0
    %166 = vmatpush1.msra.mxu0 0.0
    %167 = vmatprep.subr.mxu0 0.0
    %168 = vmatpush1.msra.mxu0 0.0
    %169 = vmatprep.subr.mxu0 0.0
    %170 = vmatpush1.msra.mxu0 0.0
    %171 = vmatprep.subr.mxu0 0.0
    %172 = vmatpush1.msra.mxu0 0.0
    %173 = vmatprep.subr.mxu0 0.0
    %174 = vmatpush1.msra.mxu0 0.0
    %175 = vmatprep.subr.mxu0 0.0
    %176 = vmatpush1.msra.mxu0 0.0
    %177 = vmatprep.subr.mxu0 0.0
    %178 = vmatpush1.msra.mxu0 0.0
    %179 = vmatprep.subr.mxu0 0.0
    %180 = vmatpush1.msra.mxu0 0.0
    %181 = vmatprep.subr.mxu0 0.0
    %182 = vmatpush1.msra.mxu0 0.0
    %183 = vmatprep.subr.mxu0 0.0
    %184 = vmatpush1.msra.mxu0 0.0
    %185 = vmatprep.subr.mxu0 0.0
    %186 = vmatpush1.msra.mxu0 0.0
    %187 = vmatprep.subr.mxu0 0.0
    %188 = vmatpush1.msra.mxu0 0.0
    %189 = vmatprep.subr.mxu0 0.0
    %190 = vmatpush1.msra.mxu0 0.0
    %191 = vmatprep.subr.mxu0 0.0
    %192 = vmatpush1.msra.mxu0 0.0
    %193 = vmatprep.subr.mxu0 0.0
    %194 = vmatpush1.msra.mxu0 0.0
    %195 = vmatprep.subr.mxu0 0.0
    %196 = vmatpush1.msra.mxu0 0.0
    %197 = vmatprep.subr.mxu0 0.0
    %198 = vmatpush1.msra.mxu0 0.0
    %199 = vmatprep.subr.mxu0 0.0
    %200 = vmatpush1.msra.mxu0 0.0
    %201 = vmatprep.subr.mxu0 0.0
    %202 = vmatpush1.msra.mxu0 0.0
    %203 = vmatprep.subr.mxu0 0.0
    %204 = vmatpush1.msra.mxu0 0.0
    %205 = vmatprep.subr.mxu0 0.0
    %206 = vmatpush1.msra.mxu0 0.0
    %207 = vmatprep.subr.mxu0 0.0
    %208 = vmatpush1.msra.mxu0 0.0
    %209 = vmatprep.mubr.f32.mxu0 0.0
    %210 = vmatmul.mubr.f32.gmra.mrb[0].mxu0 %v143
    %v211 = vpop.f32.mrb[0].mxu0
    %v212 = vadd.f32 0.0, %v211
    %v213 = vpop.f32.mrb[0].mxu0
    %214 = vdwg.mxu0
    %v215 = vld [vmem:[%s4] sm:$0x3]
    %v216 = vsel %vm24, %v212, 0.0
    %v217 = vrot.slane %v216, 4
    %v218 = vadd.f32 %v216, %v217
    %v219 = vrot.slane %v218, 2
    %v220 = vadd.f32 %v218, %v219
    %v221 = vrot.slane %v220, 1
    %v222 = vadd.f32 %v220, %v221
    %v223 = vmul.f32 %v222, 0.125
    %v224 = vmul.f32 %v212, %v212
    %v225 = vsel %vm24, %v224, 0.0
    %v226 = vrot.slane %v225, 4
    %v227 = vadd.f32 %v225, %v226
    %v228 = vrot.slane %v227, 2
    %v229 = vadd.f32 %v227, %v228
    %v230 = vrot.slane %v229, 1
    %v231 = vadd.f32 %v229, %v230
    %v232 = vmul.f32 %v231, 0.125
    %v233 = vmul.f32 %v223, %v223
    %v234 = vsub.f32 %v232, %v233
    %v235 = vadd.f32 %v234, 1e-05
    %v236 = vrsqrt.pop %v235
    %v237 = vmul.f32 %v215, %v236
    %v238 = vmul.f32 %v223, %v237
    %v240 = vrot.slane %v238, 7
    %v242 = vsub.f32 %v215, %v240
    %v243 = vlaneseq
    %v244 = vshrl.u32 %v243, 7
    %v245 = vsub.s32 0, %v244
    %v246 = vrot.slane %v237, %v245
    %v247 = vmul.f32 %v212, %v246
    %v248 = vlaneseq
    %v249 = vshrl.u32 %v248, 7
    %v250 = vsub.s32 1, %v249
    %v251 = vrot.slane %v242, %v250
    %v252 = vadd.f32 %v247, %v251
    %v253 = vadd.f32 %v252, %v21
    %v254 = vmax.f32 %v253, 0.0
    %255 = vst.msk [vmem:[#allocation2] sm:$0xff] %vm24, %v254
    // Predicated region
    $region22: #{residual_block_pallas.1} parent=1 // pred_check
      _
    $region23: #{residual_block_pallas.1} parent=1 // pred_check_branch
      %257 = sbr.rel (0) target = $region25
    $region24: #{residual_block_pallas.1} parent=1 // pred_region
      %s259 = ssub.s32 128, 128
      %260 = vsyncadd [#allocation3], %s259
      %s262 = sshll.u32 [#allocation2], 4
      %s263 = int_to_ptr.vmem [resolvable:$true] %s262
      %265 = dma.vmem_to_hbm [thread:$0]  %s263, 128, %s5, [#allocation3]
    $region25: #{residual_block_pallas.1} parent=1 // pred_fallthru
      _
    // Predicated region
    $region26: #{residual_block_pallas.1} parent=1 // pred_check
      _
    $region27: #{residual_block_pallas.1} parent=1 // pred_check_branch
      %267 = sbr.rel (0) target = $region29
    $region28: #{residual_block_pallas.1} parent=1 // pred_region
      %268 = dma.done [#allocation3], 128
    $region29: #{residual_block_pallas.1} parent=1 // pred_fallthru
      _
    %269 = vsyncpa [#allocation3], 1

</llo_original>
